<compile_context>
chip_gen: v7x
topology: tpu7x:2x2x1
jax: 0.10.0
libtpu: 0.0.40
codegen_flags: <defaults>
</compile_context>

<pallas_src>
import math

import jax
import jax.numpy as jnp
from jax.experimental import pallas as pl
from jax.experimental.pallas import tpu as pltpu

HALF_LOG_2PI = 0.5 * math.log(2.0 * math.pi)


def _augment_vflow_kernel(x_ref, n_ref, mean_ref, std_ref, z_ref, ldj_ref):
    """z = [x, mean + std*n01]; ldj = 0.5*sum(n01^2) + sum(log std) + k*0.5*log(2pi)."""
    x = x_ref[...]        # (TM, in_size)
    n01 = n_ref[...]      # (TM, aug_size) standard-normal noise
    mean = mean_ref[...]  # (1, aug_size) -> broadcasts over rows
    std = std_ref[...]    # (1, aug_size)

    e = mean + std * n01  # (TM, aug_size)

    # One full-width store of the concatenated row (single vst per tile instead of
    # two masked sub-128-lane partial writes).
    z_ref[...] = jnp.concatenate([x, e], axis=-1)

    # Exact simplification: (e - mean)/std == n01, so
    #   -log_prob(e) = 0.5*n01^2 + log(std) + 0.5*log(2*pi)
    aug_size = n01.shape[-1]
    const = jnp.sum(jnp.log(std), axis=-1, keepdims=True) + aug_size * HALF_LOG_2PI  # (1, 1)
    ldj_ref[...] = 0.5 * jnp.sum(n01 * n01, axis=-1, keepdims=True) + const


def augment_vflow_forward(x, aug_dist_mean, aug_dist_var, key, *, row_tile=512):
    """JAX/Pallas equivalent of Augment_VFlow.forward.

    Args:
      x:             [..., input_size] float array.
      aug_dist_mean: [aug_size] buffer (zeros in the module).
      aug_dist_var:  [aug_size] buffer (ones in the module); the PyTorch module passes
                     it to Normal as the *scale*, so it is used as std here.
      key:           jax.random key for the noise draw.

    Returns:
      z:   [..., input_size + aug_size]
      ldj: x.shape[:-1]
    """
    *lead, in_size = x.shape
    aug_size = int(aug_dist_mean.shape[-1])
    d_out = in_size + aug_size
    m = 1
    for d in lead:
        m *= int(d)

    x2d = x.reshape(m, in_size).astype(jnp.float32)
    mean2d = aug_dist_mean.reshape(1, aug_size).astype(jnp.float32)
    std2d = aug_dist_var.reshape(1, aug_size).astype(jnp.float32)

    # TODO(synk): switch to in-kernel pltpu.prng_random_bits with a per-tile seed
    # (seed + pl.program_id(0)) once the deployment path guarantees Mosaic lowering;
    # the interpreted/CPU fallback has no lowering for prng_seed, so the noise is
    # drawn here with the JAX PRNG and streamed into the kernel.
    noise = jax.random.normal(key, (m, aug_size), dtype=jnp.float32)

    # Row tile: multiple of 8 sublanes (or the full extent). At row_tile=512 the
    # double-buffered working set (x + noise + z + ldj tiles) is well under 1 MiB,
    # far inside v7x's 32 MiB default scoped-VMEM budget.
    tm = m if m <= row_tile else row_tile
    grid = (pl.cdiv(m, tm),)

    cost = pl.CostEstimate(
        flops=4 * m * aug_size,
        transcendentals=aug_size * grid[0],
        bytes_accessed=4 * (m * in_size + m * aug_size + m * d_out + m),
    )

    z2d, ldj2d = pl.pallas_call(
        _augment_vflow_kernel,
        out_shape=(
            jax.ShapeDtypeStruct((m, d_out), jnp.float32),
            jax.ShapeDtypeStruct((m, 1), jnp.float32),
        ),
        grid=grid,
        in_specs=[
            pl.BlockSpec((tm, in_size), lambda i: (i, 0)),    # x rows
            pl.BlockSpec((tm, aug_size), lambda i: (i, 0)),   # noise rows
            pl.BlockSpec((1, aug_size), lambda i: (0, 0)),    # aug mean (resident)
            pl.BlockSpec((1, aug_size), lambda i: (0, 0)),    # aug std  (resident)
        ],
        out_specs=(
            pl.BlockSpec((tm, d_out), lambda i: (i, 0)),      # z
            pl.BlockSpec((tm, 1), lambda i: (i, 0)),          # ldj
        ),
        compiler_params=pltpu.CompilerParams(
            dimension_semantics=("parallel",),                # shards across v7x's 2 TCs
        ),
        cost_estimate=cost,
    )(x2d, noise, mean2d, std2d)

    z = z2d.reshape(*lead, d_out)
    ldj = ldj2d.reshape(*lead)
    return z, ldj


if __name__ == "__main__":
    # Small shapes consistent with the module: x is [batch, seq, input_size].
    batch, seq = 2, 8
    input_size, aug_size = 32, 32

    key = jax.random.PRNGKey(0)
    kx, knoise = jax.random.split(key)
    x = jax.random.normal(kx, (batch, seq, input_size), dtype=jnp.float32)

    # Deterministic buffer init, exactly as in __init__.
    aug_dist_mean = jnp.zeros((aug_size,), dtype=jnp.float32)
    aug_dist_var = jnp.ones((aug_size,), dtype=jnp.float32)

    z, ldj = augment_vflow_forward(x, aug_dist_mean, aug_dist_var, key=knoise)
    z = jax.block_until_ready(z)
    ldj = jax.block_until_ready(ldj)

    # Sanity checks.
    assert z.shape == (batch, seq, input_size + aug_size), z.shape
    assert ldj.shape == (batch, seq), ldj.shape
    # The x-part of z must be passed through unchanged.
    assert bool(jnp.allclose(z[..., :input_size], x)), "x passthrough mismatch"
    # ldj must match -sum(log_prob(e)) for the sampled e carried inside z (mean=0, std=1).
    e = z[..., input_size:]
    ref_lp = -0.5 * e * e - HALF_LOG_2PI
    ref_ldj = -jnp.sum(ref_lp, axis=-1)
    assert bool(jnp.allclose(ldj, ref_ldj, rtol=1e-5, atol=1e-5)), "ldj mismatch"
    assert bool(jnp.all(jnp.isfinite(z))) and bool(jnp.all(jnp.isfinite(ldj)))

    print("KERNEL_OK")
</pallas_src>

<mosaic_0001>
module attributes {stable_mosaic.version = 11 : i64} {
  func.func @_augment_vflow_kernel(%arg0: i32, %arg1: memref<16x32xf32, #tpu.memory_space<vmem>>, %arg2: memref<16x32xf32, #tpu.memory_space<vmem>>, %arg3: memref<1x32xf32, #tpu.memory_space<vmem>>, %arg4: memref<1x32xf32, #tpu.memory_space<vmem>>, %arg5: memref<16x64xf32, #tpu.memory_space<vmem>>, %arg6: memref<16x1xf32, #tpu.memory_space<vmem>>) attributes {dimension_semantics = [#tpu.dimension_semantics<parallel>], iteration_bounds = array<i64: 1>, scalar_prefetch = 0 : i64, scratch_operands = 0 : i64, tpu.core_type = #tpu.core_type<tc>, window_params = [{transform_indices = @transform_0, window_bounds = array<i64: 16, 32>}, {transform_indices = @transform_1, window_bounds = array<i64: 16, 32>}, {pipeline_mode = #tpu.pipeline_mode<synchronous>, transform_indices = @transform_2, window_bounds = array<i64: 1, 32>}, {pipeline_mode = #tpu.pipeline_mode<synchronous>, transform_indices = @transform_3, window_bounds = array<i64: 1, 32>}, {transform_indices = @transform_4, window_bounds = array<i64: 16, 64>}, {transform_indices = @transform_5, window_bounds = array<i64: 16, 1>}]} {
    %c0 = arith.constant 0 : index
    %c0_0 = arith.constant 0 : index
    %0 = vector.load %arg1[%c0, %c0_0] : memref<16x32xf32, #tpu.memory_space<vmem>>, vector<16x32xf32>
    %c0_1 = arith.constant 0 : index
    %c0_2 = arith.constant 0 : index
    %1 = vector.load %arg2[%c0_1, %c0_2] : memref<16x32xf32, #tpu.memory_space<vmem>>, vector<16x32xf32>
    %c0_3 = arith.constant 0 : index
    %c0_4 = arith.constant 0 : index
    %2 = vector.load %arg3[%c0_3, %c0_4] : memref<1x32xf32, #tpu.memory_space<vmem>>, vector<1x32xf32>
    %c0_5 = arith.constant 0 : index
    %c0_6 = arith.constant 0 : index
    %3 = vector.load %arg4[%c0_5, %c0_6] : memref<1x32xf32, #tpu.memory_space<vmem>>, vector<1x32xf32>
    %4 = vector.broadcast %3 : vector<1x32xf32> to vector<16x32xf32>
    %5 = arith.mulf %4, %1 : vector<16x32xf32>
    %6 = vector.broadcast %2 : vector<1x32xf32> to vector<16x32xf32>
    %7 = arith.addf %6, %5 : vector<16x32xf32>
    %8 = tpu.concatenate %0, %7 in 1 : vector<16x32xf32>, vector<16x32xf32> -> vector<16x64xf32>
    %c0_7 = arith.constant 0 : index
    %c0_8 = arith.constant 0 : index
    %9 = vector.load %arg5[%c0_7, %c0_8] : memref<16x64xf32, #tpu.memory_space<vmem>>, vector<16x64xf32>
    tpu.vector_store %arg5[%c0_7, %c0_8], %8 {strides = array<i32>} : memref<16x64xf32, #tpu.memory_space<vmem>>, vector<16x64xf32>,
    %10 = math.log %3 : vector<1x32xf32>
    %cst = arith.constant dense<0.000000e+00> : vector<1xf32>
    %11 = vector.multi_reduction <add>, %10, %cst [1] : vector<1x32xf32> to vector<1xf32>
    %12 = vector.shape_cast %11 : vector<1xf32> to vector<1x1xf32>
    %cst_9 = arith.constant 29.4060326 : f32
    %13 = vector.broadcast %cst_9 : f32 to vector<1x1xf32>
    %14 = arith.addf %12, %13 : vector<1x1xf32>
    %15 = arith.mulf %1, %1 : vector<16x32xf32>
    %cst_10 = arith.constant dense<0.000000e+00> : vector<16xf32>
    %16 = vector.multi_reduction <add>, %15, %cst_10 [1] : vector<16x32xf32> to vector<16xf32>
    %17 = vector.shape_cast %16 : vector<16xf32> to vector<16x1xf32>
    %cst_11 = arith.constant 5.000000e-01 : f32
    %18 = vector.broadcast %cst_11 : f32 to vector<16x1xf32>
    %19 = arith.mulf %18, %17 : vector<16x1xf32>
    %20 = vector.broadcast %14 : vector<1x1xf32> to vector<16x1xf32>
    %21 = arith.addf %19, %20 : vector<16x1xf32>
    %c0_12 = arith.constant 0 : index
    %c0_13 = arith.constant 0 : index
    %22 = vector.load %arg6[%c0_12, %c0_13] : memref<16x1xf32, #tpu.memory_space<vmem>>, vector<16x1xf32>
    tpu.vector_store %arg6[%c0_12, %c0_13], %21 {strides = array<i32>} : memref<16x1xf32, #tpu.memory_space<vmem>>, vector<16x1xf32>,
    return
  }
  func.func @transform_0(%arg0: i32) -> (i32, i32) {
    %c0_i32 = arith.constant 0 : i32
    %c0_i32_0 = arith.constant 0 : i32
    return %arg0, %c0_i32 : i32, i32
  }
  func.func @transform_1(%arg0: i32) -> (i32, i32) {
    %c0_i32 = arith.constant 0 : i32
    %c0_i32_0 = arith.constant 0 : i32
    return %arg0, %c0_i32 : i32, i32
  }
  func.func @transform_2(%arg0: i32) -> (i32, i32) {
    %c0_i32 = arith.constant 0 : i32
    %c0_i32_0 = arith.constant 0 : i32
    %c0_i32_1 = arith.constant 0 : i32
    return %c0_i32, %c0_i32_0 : i32, i32
  }
  func.func @transform_3(%arg0: i32) -> (i32, i32) {
    %c0_i32 = arith.constant 0 : i32
    %c0_i32_0 = arith.constant 0 : i32
    %c0_i32_1 = arith.constant 0 : i32
    return %c0_i32, %c0_i32_0 : i32, i32
  }
  func.func @transform_4(%arg0: i32) -> (i32, i32) {
    %c0_i32 = arith.constant 0 : i32
    %c0_i32_0 = arith.constant 0 : i32
    return %arg0, %c0_i32 : i32, i32
  }
  func.func @transform_5(%arg0: i32) -> (i32, i32) {
    %c0_i32 = arith.constant 0 : i32
    %c0_i32_0 = arith.constant 0 : i32
    return %arg0, %c0_i32 : i32, i32
  }
}

</mosaic_0001>

<llo_original>
// kernel: tpu_custom_call.1
$region0: #{tpu_custom_call.1}
  #allocation0 [shape = 'u32[]', space=smem, size = 0x4, offset = 0x4, fixed_abs, tag = 'smem constant byte address 0x4 - core index']
  #allocation1 [shape = 'u32[144,128]{1,0:T(1,128)}', space=vmem, size = 0x12000, scoped, tag = 'internal scratch']
  %s0 = inlined_call_operand.hbm [shape: f32[16,32], index: 0, kind: input, shape index: {}]
  %s1 = inlined_call_operand.hbm [shape: f32[16,32], index: 1, kind: input, shape index: {}]
  %s2 = inlined_call_operand.vmem [shape: f32[1,32], index: 2, kind: input, shape index: {}]
  %s3 = inlined_call_operand.vmem [shape: f32[1,32], index: 3, kind: input, shape index: {}]
  %s4 = inlined_call_operand.hbm [shape: f32[16,64], index: 4, kind: output, shape index: {0}]
  %s5 = inlined_call_operand.vmem [shape: f32[16,1], index: 5, kind: output, shape index: {1}]
  %6 = xla_tuple %s4, %s5
  %s7 = sld [smem:[#allocation0]]
  $region42: #{tpu_custom_call.1} parent=0
    _
  %s9 = ssub.s32 1, %s7
  %s10 = scalar_select 0, %s9, %s7
  $region1: #{tpu_custom_call.1} parent=0
    #allocation2 [shape = 'u8[8192]{0}', space=vmem, size = 0x2000, scoped, tag = 'input window, operand 0, single buffered']
    #allocation3 [shape = 's32[1]{0}', space=sflag, size = 0x4, scoped, tag = 'scoped memory for tpu_custom_call.1']
    #allocation4 [shape = 's32[1]{0}', space=sflag, size = 0x4, scoped, tag = 'scoped memory for tpu_custom_call.1']
    #allocation5 [shape = 'u8[8192]{0}', space=vmem, size = 0x2000, scoped, tag = 'input window, operand 1, single buffered']
    #allocation6 [shape = 's32[1]{0}', space=sflag, size = 0x4, scoped, tag = 'scoped memory for tpu_custom_call.1']
    #allocation7 [shape = 'u8[8192]{0}', space=vmem, size = 0x2000, scoped, tag = 'output window, operand 0, single buffered']
    %11 = vsyncpa [#allocation3], 0
    %12 = vsyncpa [#allocation6], 0
    %13 = vsyncpa [#allocation4], 0
    // Predicated region
    $region2: #{tpu_custom_call.1} parent=1 // pred_check
      _
    $region3: #{tpu_custom_call.1} parent=1 // pred_check_branch
      %15 = sbr.rel (0) target = $region5
    $region4: #{tpu_custom_call.1} parent=1 // pred_region
      %s17 = ssub.s32 256, 256
      %18 = vsyncadd [#allocation3], %s17
      %s19 = sshll.u32 [#allocation2], 4
      %s20 = int_to_ptr.vmem [resolvable:$true] %s19
      %25 = dma.hbm_to_vmem [thread:$0]  %s0, 256, %s20, [#allocation3], 128, 128, 8
    $region5: #{tpu_custom_call.1} parent=1 // pred_fallthru
      _
    // Predicated region
    $region6: #{tpu_custom_call.1} parent=1 // pred_check
      _
    $region7: #{tpu_custom_call.1} parent=1 // pred_check_branch
      %27 = sbr.rel (0) target = $region9
    $region8: #{tpu_custom_call.1} parent=1 // pred_region
      %s29 = ssub.s32 256, 256
      %30 = vsyncadd [#allocation6], %s29
      %s31 = sshll.u32 [#allocation5], 4
      %s32 = int_to_ptr.vmem [resolvable:$true] %s31
      %37 = dma.hbm_to_vmem [thread:$0]  %s1, 256, %s32, [#allocation6], 128, 128, 8
    $region9: #{tpu_custom_call.1} parent=1 // pred_fallthru
      _
    // Predicated region
    $region10: #{tpu_custom_call.1} parent=1 // pred_check
      _
    $region11: #{tpu_custom_call.1} parent=1 // pred_check_branch
      %39 = sbr.rel (0) target = $region13
    $region12: #{tpu_custom_call.1} parent=1 // pred_region
      _
    $region13: #{tpu_custom_call.1} parent=1 // pred_fallthru
      _
    // Predicated region
    $region14: #{tpu_custom_call.1} parent=1 // pred_check
      _
    $region15: #{tpu_custom_call.1} parent=1 // pred_check_branch
      %41 = sbr.rel (0) target = $region17
    $region16: #{tpu_custom_call.1} parent=1 // pred_region
      _
    $region17: #{tpu_custom_call.1} parent=1 // pred_fallthru
      _
    // Predicated region
    $region18: #{tpu_custom_call.1} parent=1 // pred_check
      _
    $region19: #{tpu_custom_call.1} parent=1 // pred_check_branch
      %43 = sbr.rel (0) target = $region21
    $region20: #{tpu_custom_call.1} parent=1 // pred_region
      %44 = dma.done [#allocation3], 256
    $region21: #{tpu_custom_call.1} parent=1 // pred_fallthru
      _
    // Predicated region
    $region22: #{tpu_custom_call.1} parent=1 // pred_check
      _
    $region23: #{tpu_custom_call.1} parent=1 // pred_check_branch
      %46 = sbr.rel (0) target = $region25
    $region24: #{tpu_custom_call.1} parent=1 // pred_region
      %47 = dma.done [#allocation6], 256
    $region25: #{tpu_custom_call.1} parent=1 // pred_fallthru
      _
    %v48 = vld [vmem:[#allocation2] sm:$0xff]
    %v49 = vld [vmem:[#allocation2 + $0x8] sm:$0xff]
    %v50 = vld [vmem:[#allocation5] sm:$0xff]
    %v51 = vld [vmem:[#allocation5 + $0x8] sm:$0xff]
    %v52 = vld [vmem:[%s2] sm:$0x1]
    %v53 = vld [vmem:[%s3] sm:$0x1]
    %v55 = vlaneseq
    %v56 = vshrl.u32 %v55, 7
    %v57 = vsub.s32 0, %v56
    %v58 = vrot.slane %v53, %v57
    %v60 = vmul.f32 %v58, %v50
    %v61 = vmul.f32 %v58, %v51
    %v63 = vlaneseq
    %v64 = vshrl.u32 %v63, 7
    %v65 = vsub.s32 0, %v64
    %v66 = vrot.slane %v52, %v65
    %v68 = vadd.f32 %v66, %v60
    %v69 = vadd.f32 %v66, %v61
    %72 = vrot.lane.b32.xlu0 %v68, 32
    %v73 = vpop.permute.xlu0 %72
    %74 = vrot.lane.b32.xlu0 %v69, 32
    %v75 = vpop.permute.xlu0 %74
    %vm78 = vcmask 261120
    %v79 = vsel %vm78, %v48, %v73
    %v80 = vsel %vm78, %v49, %v75
    %vm81 = vcmask 523264
    %82 = vst.msk [vmem:[#allocation7] sm:$0xff] %vm81, %v79
    %83 = vst.msk [vmem:[#allocation7 + $0x8] sm:$0xff] %vm81, %v80
    %v84 = vlog2.pop %v53
    %v85 = vmul.f32 %v84, 0.6931472
    %vm86 = vcmask 253952
    %v87 = vsel %vm86, %v85, 0.0
    %88 = vadd.xlane.f32.xlu0 %v87
    %v89 = vpop.xlane.xlu0 %88
    %v90 = vadd.f32 %v89, 29.406033
    %v91 = vmul.f32 %v50, %v50
    %v92 = vmul.f32 %v51, %v51
    %v93 = vsel %vm78, %v91, 0.0
    %94 = vadd.xlane.f32.xlu0 %v93
    %v95 = vpop.xlane.xlu0 %94
    %v96 = vsel %vm78, %v92, 0.0
    %97 = vadd.xlane.f32.xlu0 %v96
    %v98 = vpop.xlane.xlu0 %97
    %v99 = vmul.f32 %v95, 0.5
    %v100 = vmul.f32 %v98, 0.5
    %v101 = vlaneseq
    %v102 = vshrl.u32 %v101, 7
    %v103 = vsub.s32 0, %v102
    %v104 = vrot.slane %v90, %v103
    %v105 = vadd.f32 %v99, %v104
    %v106 = vadd.f32 %v100, %v104
    %vm107 = vcmask 7168
    %108 = vst.msk [vmem:[%s5] sm:$0xff] %vm107, %v105
    %109 = vst.msk [vmem:[%s5 + $0x8] sm:$0xff] %vm107, %v106
    // Predicated region
    $region26: #{tpu_custom_call.1} parent=1 // pred_check
      _
    $region27: #{tpu_custom_call.1} parent=1 // pred_check_branch
      %111 = sbr.rel (0) target = $region29
    $region28: #{tpu_custom_call.1} parent=1 // pred_region
      %s113 = ssub.s32 256, 256
      %114 = vsyncadd [#allocation4], %s113
      %s115 = sshll.u32 [#allocation7], 4
      %s116 = int_to_ptr.vmem [resolvable:$true] %s115
      %121 = dma.vmem_to_hbm [thread:$0]  %s116, 256, %s4, [#allocation4], 128, 128, 8
    $region29: #{tpu_custom_call.1} parent=1 // pred_fallthru
      _
    // Predicated region
    $region30: #{tpu_custom_call.1} parent=1 // pred_check
      _
    $region31: #{tpu_custom_call.1} parent=1 // pred_check_branch
      %123 = sbr.rel (0) target = $region33
    $region32: #{tpu_custom_call.1} parent=1 // pred_region
      _
    $region33: #{tpu_custom_call.1} parent=1 // pred_fallthru
      _
    // Predicated region
    $region34: #{tpu_custom_call.1} parent=1 // pred_check
      _
    $region35: #{tpu_custom_call.1} parent=1 // pred_check_branch
      %125 = sbr.rel (0) target = $region37
    $region36: #{tpu_custom_call.1} parent=1 // pred_region
      %126 = dma.done [#allocation4], 256
    $region37: #{tpu_custom_call.1} parent=1 // pred_fallthru
      _
    // Predicated region
    $region38: #{tpu_custom_call.1} parent=1 // pred_check
      _
    $region39: #{tpu_custom_call.1} parent=1 // pred_check_branch
      %128 = sbr.rel (0) target = $region41
    $region40: #{tpu_custom_call.1} parent=1 // pred_region
      _
    $region41: #{tpu_custom_call.1} parent=1 // pred_fallthru
      _
    %129 = vsyncpa [#allocation3], 1
    %130 = vsyncpa [#allocation6], 1
    %131 = vsyncpa [#allocation4], 1

</llo_original>
